<compile_context>
chip_gen: v7x
topology: tpu7x:2x2x1
jax: 0.10.0
libtpu: 0.0.40
codegen_flags: <defaults>
</compile_context>

<pallas_src>
import functools

import jax
import jax.numpy as jnp
from jax.experimental import pallas as pl
from jax.experimental.pallas import tpu as pltpu

N_ATOMS = 51
HID = 128              # hidden dims zero-padded to one full lane group
_INV_255 = 1.0 / 255.0


def _round_up(x, m):
    return ((x + m - 1) // m) * m


def _cdiv(a, b):
    return -(-a // b)


def _qnet_kernel(outputs, w_pad,
                 x_ref,
                 w1_ref, b1_ref, w2_ref, b2_ref, w3_ref, b3_ref,
                 wfc_ref, bfc_ref, wq_ref, bq_ref,
                 out_ref):
    """One batch tile: full MLP + masked per-action softmax on a 128-lane slab."""
    x = x_ref[...]                                   # (tb, 4); 1/255 folded into w1

    # feature_extraction (hidden dims padded to 128; exact since ReLU(0)=0).
    h = jnp.dot(x, w1_ref[...], preferred_element_type=jnp.float32) + b1_ref[...]
    h = jnp.maximum(h, 0.0)
    h = jnp.dot(h, w2_ref[...], preferred_element_type=jnp.float32) + b2_ref[...]
    h = jnp.maximum(h, 0.0)
    h = jnp.dot(h, w3_ref[...], preferred_element_type=jnp.float32) + b3_ref[...]
    h = jnp.maximum(h, 0.0)

    # fc: Linear(32->512) + ReLU -- bf16 operands, f32 accumulation on the MXU.
    h = jnp.dot(h.astype(jnp.bfloat16), wfc_ref[...],
                preferred_element_type=jnp.float32) + bfc_ref[...]
    h = jnp.maximum(h, 0.0)

    # fc_q: Linear(512 -> outputs*51), N padded to w_pad (= 128 for outputs=2).
    logits = jnp.dot(h.astype(jnp.bfloat16), wq_ref[...],
                     preferred_element_type=jnp.float32) + bq_ref[...]

    # Per-action softmax over 51-atom lane groups via lane masks (no relayout,
    # single exp pass over the (tb, w_pad) tile).
    lane = jax.lax.broadcasted_iota(jnp.int32, (1, w_pad), 1)
    valid = lane < outputs * N_ATOMS
    m_b = jnp.zeros_like(logits)
    for a in range(outputs):                          # outputs is small; static unroll
        mask = (lane >= a * N_ATOMS) & (lane < (a + 1) * N_ATOMS)
        m_a = jnp.max(jnp.where(mask, logits, -jnp.inf), axis=-1, keepdims=True)
        m_b = m_b + jnp.where(mask, m_a, 0.0)
    e = jnp.where(valid, jnp.exp(logits - m_b), 0.0)
    d_b = jnp.zeros_like(logits)
    for a in range(outputs):
        mask = (lane >= a * N_ATOMS) & (lane < (a + 1) * N_ATOMS)
        s_a = jnp.sum(jnp.where(mask, e, 0.0), axis=-1, keepdims=True)
        d_b = d_b + jnp.where(mask, s_a, 0.0)
    # Exact normalization (approx reciprocal missed the required tolerance).
    out_ref[...] = e / jnp.where(valid, d_b, 1.0)


def prepare_params(params, outputs):
    """One-time weight prep (hoisted out of the per-call path): fold 1/255 into
    w1, zero-pad hidden dims to 128, pad fc_q's N to the next 128-lane multiple,
    cast the two big weights to bf16.  All padding preserves exact math."""
    w1, b1, w2, b2, w3, b3, wfc, bfc, wq, bq = params
    w_logits = outputs * N_ATOMS
    w_pad = _round_up(w_logits, 128)

    # Linear(4,64): fold 1/255 into the weight, pad out dim 64 -> 128.
    w1p = jnp.zeros((4, HID), jnp.float32).at[:, :64].set(w1 * _INV_255)
    b1p = jnp.zeros((1, HID), jnp.float32).at[:, :64].set(b1)
    # Linear(64,128): pad K 64 -> 128 with zero rows.
    w2p = jnp.zeros((HID, 128), jnp.float32).at[:64, :].set(w2)
    b2p = b2
    # Linear(128,32): pad out dim 32 -> 128.
    w3p = jnp.zeros((128, HID), jnp.float32).at[:, :32].set(w3)
    b3p = jnp.zeros((1, HID), jnp.float32).at[:, :32].set(b3)
    # fc: Linear(32,512): pad K 32 -> 128; bf16 operands for the MXU.
    wfcp = jnp.zeros((HID, 512), jnp.float32).at[:32, :].set(wfc).astype(jnp.bfloat16)
    bfcp = bfc
    # fc_q: Linear(512, outputs*51): pad N to one 128-lane multiple; bf16.
    wqp = jnp.zeros((512, w_pad), jnp.float32).at[:, :w_logits].set(wq).astype(jnp.bfloat16)
    bqp = jnp.zeros((1, w_pad), jnp.float32).at[:, :w_logits].set(bq)

    return (w1p, b1p, w2p, b2p, w3p, b3p, wfcp, bfcp, wqp, bqp)


def _choose_batch_tile(B, block_b):
    """Batch tile: multiple of 16 (bf16 sublane packing), avoids near-double
    padding, and aims for >=2 grid steps so both v7x TensorCores get work."""
    b_al = _round_up(B, 16)
    n_steps = max(_cdiv(b_al, block_b), 2 if b_al >= 32 else 1)
    tb = _round_up(_cdiv(b_al, n_steps), 16)
    return tb, _round_up(b_al, tb)


def qnet_forward(x, prepared, outputs, *, block_b=1024, compact_output=True):
    """x: (B, 4) float32.  prepared = prepare_params(params, outputs).
    Returns (B, outputs, 51) softmax distributions (PyTorch forward semantics)."""
    B, F = x.shape
    w_pad = prepared[-1].shape[-1]

    tb, B_pad = _choose_batch_tile(B, block_b)
    if B_pad != B:
        x = jnp.pad(x, ((0, B_pad - B), (0, 0)))

    kernel = functools.partial(_qnet_kernel, outputs, w_pad)
    const = lambda i: (0, 0)   # weights: same full block every step (VMEM-resident)

    out = pl.pallas_call(
        kernel,
        out_shape=jax.ShapeDtypeStruct((B_pad, w_pad), jnp.float32),
        grid=(B_pad // tb,),
        in_specs=[pl.BlockSpec((tb, F), lambda i: (i, 0))]
                 + [pl.BlockSpec(p.shape, const) for p in prepared],
        out_specs=pl.BlockSpec((tb, w_pad), lambda i: (i, 0)),
        compiler_params=pltpu.CompilerParams(
            dimension_semantics=("parallel",)),
    )(x, *prepared)

    if not compact_output:
        # Padded (B_pad, w_pad) slab; real probabilities in lanes [: outputs*51].
        # Lets a fused consumer skip the compaction copy entirely.
        return out
    return out[:B, :outputs * N_ATOMS].reshape(B, outputs, N_ATOMS)


def init_params(key, outputs):
    """Deterministic synthetic parameters with PyTorch nn.Linear fan-ins,
    stored as (in_dim, out_dim) for row-major matmul."""
    dims = [(4, 64), (64, 128), (128, 32), (32, 512), (512, outputs * N_ATOMS)]
    params = []
    for i, (d_in, d_out) in enumerate(dims):
        kw, kb = jax.random.split(jax.random.fold_in(key, i))
        bound = 1.0 / jnp.sqrt(d_in)
        w = jax.random.uniform(kw, (d_in, d_out), jnp.float32, -bound, bound)
        b = jax.random.uniform(kb, (1, d_out), jnp.float32, -bound, bound)
        params += [w, b]
    return tuple(params)


def qnet_reference(x, params, outputs):
    """Pure-JAX f32 reference for sanity checking."""
    w1, b1, w2, b2, w3, b3, wfc, bfc, wq, bq = params
    h = x / 255.0
    h = jax.nn.relu(h @ w1 + b1)
    h = jax.nn.relu(h @ w2 + b2)
    h = jax.nn.relu(h @ w3 + b3)
    h = jax.nn.relu(h @ wfc + bfc)
    logits = (h @ wq + bq).reshape(x.shape[0], outputs, N_ATOMS)
    return jax.nn.softmax(logits, axis=2)


if __name__ == "__main__":
    key = jax.random.PRNGKey(0)
    outputs = 2          # number of actions (C51 head -> outputs * 51 atoms)
    batch = 8

    k_x, k_p = jax.random.split(key)
    x = jax.random.uniform(k_x, (batch, 4), jnp.float32, 0.0, 255.0)
    params = init_params(k_p, outputs)
    prepared = prepare_params(params, outputs)   # one-time, hoisted weight prep

    out = jax.block_until_ready(qnet_forward(x, prepared, outputs))
    ref = qnet_reference(x, params, outputs)

    assert out.shape == (batch, outputs, N_ATOMS)
    # Exact in-kernel normalization -> each distribution sums to 1 to f32 rounding.
    assert jnp.allclose(jnp.sum(out, axis=-1), 1.0, atol=1e-4)
    # bf16 operands on the fc / fc_q matmuls -> modest tolerance vs f32 reference.
    assert jnp.allclose(out, ref, atol=5e-3, rtol=5e-2)

    print("KERNEL_OK")
</pallas_src>

<mosaic_0001>
module attributes {stable_mosaic.version = 11 : i64} {
  func.func @_qnet_kernel(%arg0: i32, %arg1: memref<16x4xf32, #tpu.memory_space<vmem>>, %arg2: memref<4x128xf32, #tpu.memory_space<vmem>>, %arg3: memref<1x128xf32, #tpu.memory_space<vmem>>, %arg4: memref<128x128xf32, #tpu.memory_space<vmem>>, %arg5: memref<1x128xf32, #tpu.memory_space<vmem>>, %arg6: memref<128x128xf32, #tpu.memory_space<vmem>>, %arg7: memref<1x128xf32, #tpu.memory_space<vmem>>, %arg8: memref<128x512xbf16, #tpu.memory_space<vmem>>, %arg9: memref<1x512xf32, #tpu.memory_space<vmem>>, %arg10: memref<512x128xbf16, #tpu.memory_space<vmem>>, %arg11: memref<1x128xf32, #tpu.memory_space<vmem>>, %arg12: memref<16x128xf32, #tpu.memory_space<vmem>>) attributes {dimension_semantics = [#tpu.dimension_semantics<parallel>], iteration_bounds = array<i64: 1>, scalar_prefetch = 0 : i64, scratch_operands = 0 : i64, tpu.core_type = #tpu.core_type<tc>, window_params = [{transform_indices = @transform_0, window_bounds = array<i64: 16, 4>}, {pipeline_mode = #tpu.pipeline_mode<synchronous>, transform_indices = @transform_1, window_bounds = array<i64: 4, 128>}, {pipeline_mode = #tpu.pipeline_mode<synchronous>, transform_indices = @transform_2, window_bounds = array<i64: 1, 128>}, {pipeline_mode = #tpu.pipeline_mode<synchronous>, transform_indices = @transform_3, window_bounds = array<i64: 128, 128>}, {pipeline_mode = #tpu.pipeline_mode<synchronous>, transform_indices = @transform_4, window_bounds = array<i64: 1, 128>}, {pipeline_mode = #tpu.pipeline_mode<synchronous>, transform_indices = @transform_5, window_bounds = array<i64: 128, 128>}, {pipeline_mode = #tpu.pipeline_mode<synchronous>, transform_indices = @transform_6, window_bounds = array<i64: 1, 128>}, {pipeline_mode = #tpu.pipeline_mode<synchronous>, transform_indices = @transform_7, window_bounds = array<i64: 128, 512>}, {pipeline_mode = #tpu.pipeline_mode<synchronous>, transform_indices = @transform_8, window_bounds = array<i64: 1, 512>}, {pipeline_mode = #tpu.pipeline_mode<synchronous>, transform_indices = @transform_9, window_bounds = array<i64: 512, 128>}, {pipeline_mode = #tpu.pipeline_mode<synchronous>, transform_indices = @transform_10, window_bounds = array<i64: 1, 128>}, {transform_indices = @transform_11, window_bounds = array<i64: 16, 128>}]} {
    %c0 = arith.constant 0 : index
    %c0_0 = arith.constant 0 : index
    %0 = vector.load %arg1[%c0, %c0_0] : memref<16x4xf32, #tpu.memory_space<vmem>>, vector<16x4xf32>
    %c0_1 = arith.constant 0 : index
    %c0_2 = arith.constant 0 : index
    %1 = vector.load %arg2[%c0_1, %c0_2] : memref<4x128xf32, #tpu.memory_space<vmem>>, vector<4x128xf32>
    %cst = arith.constant dense<0.000000e+00> : vector<16x128xf32>
    %2 = tpu.matmul %0, %1, %cst {dimension_numbers = #tpu.dot_dimension_numbers<[1], [0], [0], [1], [0, 0, 1, 1], [], []>} : vector<16x4xf32>, vector<4x128xf32>, vector<16x128xf32> -> vector<16x128xf32>
    %c0_3 = arith.constant 0 : index
    %c0_4 = arith.constant 0 : index
    %3 = vector.load %arg3[%c0_3, %c0_4] : memref<1x128xf32, #tpu.memory_space<vmem>>, vector<1x128xf32>
    %4 = vector.broadcast %3 : vector<1x128xf32> to vector<16x128xf32>
    %5 = arith.addf %2, %4 : vector<16x128xf32>
    %cst_5 = arith.constant 0.000000e+00 : f32
    %6 = vector.broadcast %cst_5 : f32 to vector<16x128xf32>
    %7 = arith.maximumf %5, %6 : vector<16x128xf32>
    %c0_6 = arith.constant 0 : index
    %c0_7 = arith.constant 0 : index
    %8 = vector.load %arg4[%c0_6, %c0_7] : memref<128x128xf32, #tpu.memory_space<vmem>>, vector<128x128xf32>
    %cst_8 = arith.constant dense<0.000000e+00> : vector<16x128xf32>
    %9 = tpu.matmul %7, %8, %cst_8 {dimension_numbers = #tpu.dot_dimension_numbers<[1], [0], [0], [1], [0, 0, 1, 1], [], []>} : vector<16x128xf32>, vector<128x128xf32>, vector<16x128xf32> -> vector<16x128xf32>
    %c0_9 = arith.constant 0 : index
    %c0_10 = arith.constant 0 : index
    %10 = vector.load %arg5[%c0_9, %c0_10] : memref<1x128xf32, #tpu.memory_space<vmem>>, vector<1x128xf32>
    %11 = vector.broadcast %10 : vector<1x128xf32> to vector<16x128xf32>
    %12 = arith.addf %9, %11 : vector<16x128xf32>
    %cst_11 = arith.constant 0.000000e+00 : f32
    %13 = vector.broadcast %cst_11 : f32 to vector<16x128xf32>
    %14 = arith.maximumf %12, %13 : vector<16x128xf32>
    %c0_12 = arith.constant 0 : index
    %c0_13 = arith.constant 0 : index
    %15 = vector.load %arg6[%c0_12, %c0_13] : memref<128x128xf32, #tpu.memory_space<vmem>>, vector<128x128xf32>
    %cst_14 = arith.constant dense<0.000000e+00> : vector<16x128xf32>
    %16 = tpu.matmul %14, %15, %cst_14 {dimension_numbers = #tpu.dot_dimension_numbers<[1], [0], [0], [1], [0, 0, 1, 1], [], []>} : vector<16x128xf32>, vector<128x128xf32>, vector<16x128xf32> -> vector<16x128xf32>
    %c0_15 = arith.constant 0 : index
    %c0_16 = arith.constant 0 : index
    %17 = vector.load %arg7[%c0_15, %c0_16] : memref<1x128xf32, #tpu.memory_space<vmem>>, vector<1x128xf32>
    %18 = vector.broadcast %17 : vector<1x128xf32> to vector<16x128xf32>
    %19 = arith.addf %16, %18 : vector<16x128xf32>
    %cst_17 = arith.constant 0.000000e+00 : f32
    %20 = vector.broadcast %cst_17 : f32 to vector<16x128xf32>
    %21 = arith.maximumf %19, %20 : vector<16x128xf32>
    %22 = arith.truncf %21 : vector<16x128xf32> to vector<16x128xbf16>
    %c0_18 = arith.constant 0 : index
    %c0_19 = arith.constant 0 : index
    %23 = vector.load %arg8[%c0_18, %c0_19] : memref<128x512xbf16, #tpu.memory_space<vmem>>, vector<128x512xbf16>
    %cst_20 = arith.constant dense<0.000000e+00> : vector<16x512xf32>
    %24 = tpu.matmul %22, %23, %cst_20 {dimension_numbers = #tpu.dot_dimension_numbers<[1], [0], [0], [1], [0, 0, 1, 1], [], []>} : vector<16x128xbf16>, vector<128x512xbf16>, vector<16x512xf32> -> vector<16x512xf32>
    %c0_21 = arith.constant 0 : index
    %c0_22 = arith.constant 0 : index
    %25 = vector.load %arg9[%c0_21, %c0_22] : memref<1x512xf32, #tpu.memory_space<vmem>>, vector<1x512xf32>
    %26 = vector.broadcast %25 : vector<1x512xf32> to vector<16x512xf32>
    %27 = arith.addf %24, %26 : vector<16x512xf32>
    %cst_23 = arith.constant 0.000000e+00 : f32
    %28 = vector.broadcast %cst_23 : f32 to vector<16x512xf32>
    %29 = arith.maximumf %27, %28 : vector<16x512xf32>
    %30 = arith.truncf %29 : vector<16x512xf32> to vector<16x512xbf16>
    %c0_24 = arith.constant 0 : index
    %c0_25 = arith.constant 0 : index
    %31 = vector.load %arg10[%c0_24, %c0_25] : memref<512x128xbf16, #tpu.memory_space<vmem>>, vector<512x128xbf16>
    %cst_26 = arith.constant dense<0.000000e+00> : vector<16x128xf32>
    %32 = tpu.matmul %30, %31, %cst_26 {dimension_numbers = #tpu.dot_dimension_numbers<[1], [0], [0], [1], [0, 0, 1, 1], [], []>} : vector<16x512xbf16>, vector<512x128xbf16>, vector<16x128xf32> -> vector<16x128xf32>
    %c0_27 = arith.constant 0 : index
    %c0_28 = arith.constant 0 : index
    %33 = vector.load %arg11[%c0_27, %c0_28] : memref<1x128xf32, #tpu.memory_space<vmem>>, vector<1x128xf32>
    %34 = vector.broadcast %33 : vector<1x128xf32> to vector<16x128xf32>
    %35 = arith.addf %32, %34 : vector<16x128xf32>
    %36 = tpu.iota {dimensions = array<i32: 1>} : vector<1x128xi32>
    %c102_i32 = arith.constant 102 : i32
    %37 = vector.broadcast %c102_i32 : i32 to vector<1x128xi32>
    %38 = arith.cmpi slt, %36, %37 : vector<1x128xi32>
    %cst_29 = arith.constant 0.000000e+00 : f32
    %39 = vector.broadcast %cst_29 : f32 to vector<16x128xf32>
    %c0_i32 = arith.constant 0 : i32
    %40 = vector.broadcast %c0_i32 : i32 to vector<1x128xi32>
    %41 = arith.cmpi sge, %36, %40 : vector<1x128xi32>
    %c51_i32 = arith.constant 51 : i32
    %42 = vector.broadcast %c51_i32 : i32 to vector<1x128xi32>
    %43 = arith.cmpi slt, %36, %42 : vector<1x128xi32>
    %44 = arith.andi %41, %43 : vector<1x128xi1>
    %cst_30 = arith.constant 0xFF800000 : f32
    %45 = vector.shape_cast %44 : vector<1x128xi1> to vector<1x128xi1>
    %46 = vector.broadcast %45 : vector<1x128xi1> to vector<16x128xi1>
    %47 = vector.broadcast %cst_30 : f32 to vector<16x128xf32>
    %48 = arith.select %46, %35, %47 : vector<16x128xi1>, vector<16x128xf32>
    %cst_31 = arith.constant dense<0xFF800000> : vector<16xf32>
    %49 = vector.multi_reduction <maximumf>, %48, %cst_31 [1] : vector<16x128xf32> to vector<16xf32>
    %50 = vector.shape_cast %49 : vector<16xf32> to vector<16x1xf32>
    %cst_32 = arith.constant 0.000000e+00 : f32
    %51 = vector.shape_cast %44 : vector<1x128xi1> to vector<1x128xi1>
    %52 = vector.broadcast %51 : vector<1x128xi1> to vector<16x128xi1>
    %53 = vector.shape_cast %50 : vector<16x1xf32> to vector<16x1xf32>
    %54 = vector.broadcast %53 : vector<16x1xf32> to vector<16x128xf32>
    %55 = vector.broadcast %cst_32 : f32 to vector<16x128xf32>
    %56 = arith.select %52, %54, %55 : vector<16x128xi1>, vector<16x128xf32>
    %57 = arith.addf %39, %56 : vector<16x128xf32>
    %c51_i32_33 = arith.constant 51 : i32
    %58 = vector.broadcast %c51_i32_33 : i32 to vector<1x128xi32>
    %59 = arith.cmpi sge, %36, %58 : vector<1x128xi32>
    %c102_i32_34 = arith.constant 102 : i32
    %60 = vector.broadcast %c102_i32_34 : i32 to vector<1x128xi32>
    %61 = arith.cmpi slt, %36, %60 : vector<1x128xi32>
    %62 = arith.andi %59, %61 : vector<1x128xi1>
    %cst_35 = arith.constant 0xFF800000 : f32
    %63 = vector.shape_cast %62 : vector<1x128xi1> to vector<1x128xi1>
    %64 = vector.broadcast %63 : vector<1x128xi1> to vector<16x128xi1>
    %65 = vector.broadcast %cst_35 : f32 to vector<16x128xf32>
    %66 = arith.select %64, %35, %65 : vector<16x128xi1>, vector<16x128xf32>
    %cst_36 = arith.constant dense<0xFF800000> : vector<16xf32>
    %67 = vector.multi_reduction <maximumf>, %66, %cst_36 [1] : vector<16x128xf32> to vector<16xf32>
    %68 = vector.shape_cast %67 : vector<16xf32> to vector<16x1xf32>
    %cst_37 = arith.constant 0.000000e+00 : f32
    %69 = vector.shape_cast %62 : vector<1x128xi1> to vector<1x128xi1>
    %70 = vector.broadcast %69 : vector<1x128xi1> to vector<16x128xi1>
    %71 = vector.shape_cast %68 : vector<16x1xf32> to vector<16x1xf32>
    %72 = vector.broadcast %71 : vector<16x1xf32> to vector<16x128xf32>
    %73 = vector.broadcast %cst_37 : f32 to vector<16x128xf32>
    %74 = arith.select %70, %72, %73 : vector<16x128xi1>, vector<16x128xf32>
    %75 = arith.addf %57, %74 : vector<16x128xf32>
    %76 = arith.subf %35, %75 : vector<16x128xf32>
    %77 = math.exp %76 : vector<16x128xf32>
    %cst_38 = arith.constant 0.000000e+00 : f32
    %78 = vector.shape_cast %38 : vector<1x128xi1> to vector<1x128xi1>
    %79 = vector.broadcast %78 : vector<1x128xi1> to vector<16x128xi1>
    %80 = vector.broadcast %cst_38 : f32 to vector<16x128xf32>
    %81 = arith.select %79, %77, %80 : vector<16x128xi1>, vector<16x128xf32>
    %cst_39 = arith.constant 0.000000e+00 : f32
    %82 = vector.broadcast %cst_39 : f32 to vector<16x128xf32>
    %c0_i32_40 = arith.constant 0 : i32
    %83 = vector.broadcast %c0_i32_40 : i32 to vector<1x128xi32>
    %84 = arith.cmpi sge, %36, %83 : vector<1x128xi32>
    %c51_i32_41 = arith.constant 51 : i32
    %85 = vector.broadcast %c51_i32_41 : i32 to vector<1x128xi32>
    %86 = arith.cmpi slt, %36, %85 : vector<1x128xi32>
    %87 = arith.andi %84, %86 : vector<1x128xi1>
    %cst_42 = arith.constant 0.000000e+00 : f32
    %88 = vector.shape_cast %87 : vector<1x128xi1> to vector<1x128xi1>
    %89 = vector.broadcast %88 : vector<1x128xi1> to vector<16x128xi1>
    %90 = vector.broadcast %cst_42 : f32 to vector<16x128xf32>
    %91 = arith.select %89, %81, %90 : vector<16x128xi1>, vector<16x128xf32>
    %cst_43 = arith.constant dense<0.000000e+00> : vector<16xf32>
    %92 = vector.multi_reduction <add>, %91, %cst_43 [1] : vector<16x128xf32> to vector<16xf32>
    %93 = vector.shape_cast %92 : vector<16xf32> to vector<16x1xf32>
    %cst_44 = arith.constant 0.000000e+00 : f32
    %94 = vector.shape_cast %87 : vector<1x128xi1> to vector<1x128xi1>
    %95 = vector.broadcast %94 : vector<1x128xi1> to vector<16x128xi1>
    %96 = vector.shape_cast %93 : vector<16x1xf32> to vector<16x1xf32>
    %97 = vector.broadcast %96 : vector<16x1xf32> to vector<16x128xf32>
    %98 = vector.broadcast %cst_44 : f32 to vector<16x128xf32>
    %99 = arith.select %95, %97, %98 : vector<16x128xi1>, vector<16x128xf32>
    %100 = arith.addf %82, %99 : vector<16x128xf32>
    %c51_i32_45 = arith.constant 51 : i32
    %101 = vector.broadcast %c51_i32_45 : i32 to vector<1x128xi32>
    %102 = arith.cmpi sge, %36, %101 : vector<1x128xi32>
    %c102_i32_46 = arith.constant 102 : i32
    %103 = vector.broadcast %c102_i32_46 : i32 to vector<1x128xi32>
    %104 = arith.cmpi slt, %36, %103 : vector<1x128xi32>
    %105 = arith.andi %102, %104 : vector<1x128xi1>
    %cst_47 = arith.constant 0.000000e+00 : f32
    %106 = vector.shape_cast %105 : vector<1x128xi1> to vector<1x128xi1>
    %107 = vector.broadcast %106 : vector<1x128xi1> to vector<16x128xi1>
    %108 = vector.broadcast %cst_47 : f32 to vector<16x128xf32>
    %109 = arith.select %107, %81, %108 : vector<16x128xi1>, vector<16x128xf32>
    %cst_48 = arith.constant dense<0.000000e+00> : vector<16xf32>
    %110 = vector.multi_reduction <add>, %109, %cst_48 [1] : vector<16x128xf32> to vector<16xf32>
    %111 = vector.shape_cast %110 : vector<16xf32> to vector<16x1xf32>
    %cst_49 = arith.constant 0.000000e+00 : f32
    %112 = vector.shape_cast %105 : vector<1x128xi1> to vector<1x128xi1>
    %113 = vector.broadcast %112 : vector<1x128xi1> to vector<16x128xi1>
    %114 = vector.shape_cast %111 : vector<16x1xf32> to vector<16x1xf32>
    %115 = vector.broadcast %114 : vector<16x1xf32> to vector<16x128xf32>
    %116 = vector.broadcast %cst_49 : f32 to vector<16x128xf32>
    %117 = arith.select %113, %115, %116 : vector<16x128xi1>, vector<16x128xf32>
    %118 = arith.addf %100, %117 : vector<16x128xf32>
    %cst_50 = arith.constant 1.000000e+00 : f32
    %119 = vector.shape_cast %38 : vector<1x128xi1> to vector<1x128xi1>
    %120 = vector.broadcast %119 : vector<1x128xi1> to vector<16x128xi1>
    %121 = vector.broadcast %cst_50 : f32 to vector<16x128xf32>
    %122 = arith.select %120, %118, %121 : vector<16x128xi1>, vector<16x128xf32>
    %123 = arith.divf %81, %122 : vector<16x128xf32>
    %c0_51 = arith.constant 0 : index
    %c0_52 = arith.constant 0 : index
    %124 = vector.load %arg12[%c0_51, %c0_52] : memref<16x128xf32, #tpu.memory_space<vmem>>, vector<16x128xf32>
    tpu.vector_store %arg12[%c0_51, %c0_52], %123 {strides = array<i32>} : memref<16x128xf32, #tpu.memory_space<vmem>>, vector<16x128xf32>,
    return
  }
  func.func @transform_0(%arg0: i32) -> (i32, i32) {
    %c0_i32 = arith.constant 0 : i32
    %c0_i32_0 = arith.constant 0 : i32
    return %arg0, %c0_i32 : i32, i32
  }
  func.func @transform_1(%arg0: i32) -> (i32, i32) {
    %c0_i32 = arith.constant 0 : i32
    %c0_i32_0 = arith.constant 0 : i32
    %c0_i32_1 = arith.constant 0 : i32
    return %c0_i32, %c0_i32_0 : i32, i32
  }
  func.func @transform_2(%arg0: i32) -> (i32, i32) {
    %c0_i32 = arith.constant 0 : i32
    %c0_i32_0 = arith.constant 0 : i32
    %c0_i32_1 = arith.constant 0 : i32
    return %c0_i32, %c0_i32_0 : i32, i32
  }
  func.func @transform_3(%arg0: i32) -> (i32, i32) {
    %c0_i32 = arith.constant 0 : i32
    %c0_i32_0 = arith.constant 0 : i32
    %c0_i32_1 = arith.constant 0 : i32
    return %c0_i32, %c0_i32_0 : i32, i32
  }
  func.func @transform_4(%arg0: i32) -> (i32, i32) {
    %c0_i32 = arith.constant 0 : i32
    %c0_i32_0 = arith.constant 0 : i32
    %c0_i32_1 = arith.constant 0 : i32
    return %c0_i32, %c0_i32_0 : i32, i32
  }
  func.func @transform_5(%arg0: i32) -> (i32, i32) {
    %c0_i32 = arith.constant 0 : i32
    %c0_i32_0 = arith.constant 0 : i32
    %c0_i32_1 = arith.constant 0 : i32
    return %c0_i32, %c0_i32_0 : i32, i32
  }
  func.func @transform_6(%arg0: i32) -> (i32, i32) {
    %c0_i32 = arith.constant 0 : i32
    %c0_i32_0 = arith.constant 0 : i32
    %c0_i32_1 = arith.constant 0 : i32
    return %c0_i32, %c0_i32_0 : i32, i32
  }
  func.func @transform_7(%arg0: i32) -> (i32, i32) {
    %c0_i32 = arith.constant 0 : i32
    %c0_i32_0 = arith.constant 0 : i32
    %c0_i32_1 = arith.constant 0 : i32
    return %c0_i32, %c0_i32_0 : i32, i32
  }
  func.func @transform_8(%arg0: i32) -> (i32, i32) {
    %c0_i32 = arith.constant 0 : i32
    %c0_i32_0 = arith.constant 0 : i32
    %c0_i32_1 = arith.constant 0 : i32
    return %c0_i32, %c0_i32_0 : i32, i32
  }
  func.func @transform_9(%arg0: i32) -> (i32, i32) {
    %c0_i32 = arith.constant 0 : i32
    %c0_i32_0 = arith.constant 0 : i32
    %c0_i32_1 = arith.constant 0 : i32
    return %c0_i32, %c0_i32_0 : i32, i32
  }
  func.func @transform_10(%arg0: i32) -> (i32, i32) {
    %c0_i32 = arith.constant 0 : i32
    %c0_i32_0 = arith.constant 0 : i32
    %c0_i32_1 = arith.constant 0 : i32
    return %c0_i32, %c0_i32_0 : i32, i32
  }
  func.func @transform_11(%arg0: i32) -> (i32, i32) {
    %c0_i32 = arith.constant 0 : i32
    %c0_i32_0 = arith.constant 0 : i32
    return %arg0, %c0_i32 : i32, i32
  }
}

</mosaic_0001>

<llo_original>
// kernel: tpu_custom_call.1
$region0: #{tpu_custom_call.1}
  #allocation0 [shape = 'u32[]', space=smem, size = 0x4, offset = 0x4, fixed_abs, tag = 'smem constant byte address 0x4 - core index']
  #allocation1 [shape = 'u32[144,128]{1,0:T(1,128)}', space=vmem, size = 0x12000, scoped, tag = 'internal scratch']
  %s0 = inlined_call_operand.vmem [shape: f32[16,4], index: 0, kind: input, shape index: {}]
  %s1 = inlined_call_operand.vmem [shape: f32[4,128], index: 1, kind: input, shape index: {}]
  %s2 = inlined_call_operand.vmem [shape: f32[1,128], index: 2, kind: input, shape index: {}]
  %s3 = inlined_call_operand.hbm [shape: f32[128,128], index: 3, kind: input, shape index: {}]
  %s4 = inlined_call_operand.vmem [shape: f32[1,128], index: 4, kind: input, shape index: {}]
  %s5 = inlined_call_operand.hbm [shape: f32[128,128], index: 5, kind: input, shape index: {}]
  %s6 = inlined_call_operand.vmem [shape: f32[1,128], index: 6, kind: input, shape index: {}]
  %s7 = inlined_call_operand.hbm [shape: bf16[128,512], index: 7, kind: input, shape index: {}]
  %s8 = inlined_call_operand.vmem [shape: f32[1,512], index: 8, kind: input, shape index: {}]
  %s9 = inlined_call_operand.hbm [shape: bf16[512,128], index: 9, kind: input, shape index: {}]
  %s10 = inlined_call_operand.vmem [shape: f32[1,128], index: 10, kind: input, shape index: {}]
  %s11 = inlined_call_operand.hbm [shape: f32[16,128], index: 11, kind: output, shape index: {}]
  %s12 = sld [smem:[#allocation0]]
  $region70: #{tpu_custom_call.1} parent=0
    _
  %s14 = ssub.s32 1, %s12
  %s15 = scalar_select 0, %s14, %s12
  $region1: #{tpu_custom_call.1} parent=0
    #allocation2 [shape = 'u8[65536]{0}', space=vmem, size = 0x10000, scoped, tag = 'input window, operand 3, single buffered']
    #allocation3 [shape = 's32[1]{0}', space=sflag, size = 0x4, scoped, tag = 'scoped memory for tpu_custom_call.1']
    #allocation4 [shape = 's32[1]{0}', space=sflag, size = 0x4, scoped, tag = 'scoped memory for tpu_custom_call.1']
    #allocation5 [shape = 'u8[65536]{0}', space=vmem, size = 0x10000, scoped, tag = 'input window, operand 5, single buffered']
    #allocation6 [shape = 's32[1]{0}', space=sflag, size = 0x4, scoped, tag = 'scoped memory for tpu_custom_call.1']
    #allocation7 [shape = 'u8[131072]{0}', space=vmem, size = 0x20000, scoped, tag = 'input window, operand 7, single buffered']
    #allocation8 [shape = 'u8[131072]{0}', space=vmem, size = 0x20000, scoped, tag = 'input window, operand 9, single buffered']
    #allocation9 [shape = 's32[1]{0}', space=sflag, size = 0x4, scoped, tag = 'scoped memory for tpu_custom_call.1']
    #allocation10 [shape = 'u8[8192]{0}', space=vmem, size = 0x2000, scoped, tag = 'output window, operand 0, single buffered']
    %16 = vsyncpa [#allocation3], 0
    %17 = vsyncpa [#allocation6], 0
    %18 = vsyncpa [#allocation9], 0
    %19 = vsyncpa [#allocation4], 0
    // Predicated region
    $region2: #{tpu_custom_call.1} parent=1 // pred_check
      _
    $region3: #{tpu_custom_call.1} parent=1 // pred_check_branch
      %21 = sbr.rel (0) target = $region5
    $region4: #{tpu_custom_call.1} parent=1 // pred_region
      _
    $region5: #{tpu_custom_call.1} parent=1 // pred_fallthru
      _
    // Predicated region
    $region6: #{tpu_custom_call.1} parent=1 // pred_check
      _
    $region7: #{tpu_custom_call.1} parent=1 // pred_check_branch
      %23 = sbr.rel (0) target = $region9
    $region8: #{tpu_custom_call.1} parent=1 // pred_region
      _
    $region9: #{tpu_custom_call.1} parent=1 // pred_fallthru
      _
    // Predicated region
    $region10: #{tpu_custom_call.1} parent=1 // pred_check
      _
    $region11: #{tpu_custom_call.1} parent=1 // pred_check_branch
      %25 = sbr.rel (0) target = $region13
    $region12: #{tpu_custom_call.1} parent=1 // pred_region
      _
    $region13: #{tpu_custom_call.1} parent=1 // pred_fallthru
      _
    // Predicated region
    $region14: #{tpu_custom_call.1} parent=1 // pred_check
      _
    $region15: #{tpu_custom_call.1} parent=1 // pred_check_branch
      %27 = sbr.rel (0) target = $region17
    $region16: #{tpu_custom_call.1} parent=1 // pred_region
      %s29 = ssub.s32 2048, 2048
      %30 = vsyncadd [#allocation3], %s29
      %s31 = sshll.u32 [#allocation2], 4
      %s32 = int_to_ptr.vmem [resolvable:$true] %s31
      %37 = dma.hbm_to_vmem [thread:$0]  %s3, 2048, %s32, [#allocation3], 128, 128, 8
    $region17: #{tpu_custom_call.1} parent=1 // pred_fallthru
      _
    // Predicated region
    $region18: #{tpu_custom_call.1} parent=1 // pred_check
      _
    $region19: #{tpu_custom_call.1} parent=1 // pred_check_branch
      %39 = sbr.rel (0) target = $region21
    $region20: #{tpu_custom_call.1} parent=1 // pred_region
      _
    $region21: #{tpu_custom_call.1} parent=1 // pred_fallthru
      _
    // Predicated region
    $region22: #{tpu_custom_call.1} parent=1 // pred_check
      _
    $region23: #{tpu_custom_call.1} parent=1 // pred_check_branch
      %41 = sbr.rel (0) target = $region25
    $region24: #{tpu_custom_call.1} parent=1 // pred_region
      %s43 = ssub.s32 2048, 2048
      %44 = vsyncadd [#allocation6], %s43
      %s45 = sshll.u32 [#allocation5], 4
      %s46 = int_to_ptr.vmem [resolvable:$true] %s45
      %51 = dma.hbm_to_vmem [thread:$0]  %s5, 2048, %s46, [#allocation6], 128, 128, 8
    $region25: #{tpu_custom_call.1} parent=1 // pred_fallthru
      _
    // Predicated region
    $region26: #{tpu_custom_call.1} parent=1 // pred_check
      _
    $region27: #{tpu_custom_call.1} parent=1 // pred_check_branch
      %53 = sbr.rel (0) target = $region29
    $region28: #{tpu_custom_call.1} parent=1 // pred_region
      _
    $region29: #{tpu_custom_call.1} parent=1 // pred_fallthru
      _
    // Predicated region
    $region30: #{tpu_custom_call.1} parent=1 // pred_check
      _
    $region31: #{tpu_custom_call.1} parent=1 // pred_check_branch
      %55 = sbr.rel (0) target = $region33
    $region32: #{tpu_custom_call.1} parent=1 // pred_region
      %s57 = ssub.s32 4096, 4096
      %58 = vsyncadd [#allocation6], %s57
      %s59 = sshll.u32 [#allocation7], 4
      %s60 = int_to_ptr.vmem [resolvable:$true] %s59
      %65 = dma.hbm_to_vmem [thread:$0]  %s7, 4096, %s60, [#allocation6], 256, 256, 16
    $region33: #{tpu_custom_call.1} parent=1 // pred_fallthru
      _
    // Predicated region
    $region34: #{tpu_custom_call.1} parent=1 // pred_check
      _
    $region35: #{tpu_custom_call.1} parent=1 // pred_check_branch
      %67 = sbr.rel (0) target = $region37
    $region36: #{tpu_custom_call.1} parent=1 // pred_region
      _
    $region37: #{tpu_custom_call.1} parent=1 // pred_fallthru
      _
    // Predicated region
    $region38: #{tpu_custom_call.1} parent=1 // pred_check
      _
    $region39: #{tpu_custom_call.1} parent=1 // pred_check_branch
      %69 = sbr.rel (0) target = $region41
    $region40: #{tpu_custom_call.1} parent=1 // pred_region
      %s71 = ssub.s32 4096, 4096
      %72 = vsyncadd [#allocation9], %s71
      %s73 = sshll.u32 [#allocation8], 4
      %s74 = int_to_ptr.vmem [resolvable:$true] %s73
      %79 = dma.hbm_to_vmem [thread:$0]  %s9, 4096, %s74, [#allocation9], 64, 64, 4
    $region41: #{tpu_custom_call.1} parent=1 // pred_fallthru
      _
    // Predicated region
    $region42: #{tpu_custom_call.1} parent=1 // pred_check
      _
    $region43: #{tpu_custom_call.1} parent=1 // pred_check_branch
      %81 = sbr.rel (0) target = $region45
    $region44: #{tpu_custom_call.1} parent=1 // pred_region
      _
    $region45: #{tpu_custom_call.1} parent=1 // pred_fallthru
      _
    // Predicated region
    $region46: #{tpu_custom_call.1} parent=1 // pred_check
      _
    $region47: #{tpu_custom_call.1} parent=1 // pred_check_branch
      %83 = sbr.rel (0) target = $region49
    $region48: #{tpu_custom_call.1} parent=1 // pred_region
      %84 = dma.done [#allocation3], 2048
    $region49: #{tpu_custom_call.1} parent=1 // pred_fallthru
      _
    // Predicated region
    $region50: #{tpu_custom_call.1} parent=1 // pred_check
      _
    $region51: #{tpu_custom_call.1} parent=1 // pred_check_branch
      %86 = sbr.rel (0) target = $region53
    $region52: #{tpu_custom_call.1} parent=1 // pred_region
      %87 = dma.done [#allocation6], 2048
    $region53: #{tpu_custom_call.1} parent=1 // pred_fallthru
      _
    // Predicated region
    $region54: #{tpu_custom_call.1} parent=1 // pred_check
      _
    $region55: #{tpu_custom_call.1} parent=1 // pred_check_branch
      %89 = sbr.rel (0) target = $region57
    $region56: #{tpu_custom_call.1} parent=1 // pred_region
      %90 = dma.done [#allocation6], 4096
    $region57: #{tpu_custom_call.1} parent=1 // pred_fallthru
      _
    // Predicated region
    $region58: #{tpu_custom_call.1} parent=1 // pred_check
      _
    $region59: #{tpu_custom_call.1} parent=1 // pred_check_branch
      %92 = sbr.rel (0) target = $region61
    $region60: #{tpu_custom_call.1} parent=1 // pred_region
      %93 = dma.done [#allocation9], 4096
    $region61: #{tpu_custom_call.1} parent=1 // pred_fallthru
      _
    %v95 = vld [vmem:[%s0] sm:$0xff]
    %v96 = vld [vmem:[%s0 + $0x8] sm:$0xff]
    %v97 = vld [vmem:[%s1] sm:$0xf]
    %v98 = vld [vmem:[%s2] sm:$0x1]
    %v100 = vlaneseq
    %v101 = vshrl.u32 %v100, 7
    %v102 = vsub.s32 0, %v101
    %v103 = vrot.slane %v98, %v102
    %vm105 = vcmask 31744
    %v107 = vsel %vm105, %v95, 0
    %v110 = vsel %vm105, %v96, 0
    %vm112 = vcmask 1043456
    %v114 = vsel %vm112, %v97, 0
    %116 = vmatprep.subr.mxu0 0.0
    %117 = vmatpush1.msra.mxu0 %v114
    %118 = vmatprep.subr.mxu0 0.0
    %119 = vmatpush1.msra.mxu0 0.0
    %120 = vmatprep.subr.mxu0 0.0
    %121 = vmatpush1.msra.mxu0 0.0
    %122 = vmatprep.subr.mxu0 0.0
    %123 = vmatpush1.msra.mxu0 0.0
    %124 = vmatprep.subr.mxu0 0.0
    %125 = vmatpush1.msra.mxu0 0.0
    %126 = vmatprep.subr.mxu0 0.0
    %127 = vmatpush1.msra.mxu0 0.0
    %128 = vmatprep.subr.mxu0 0.0
    %129 = vmatpush1.msra.mxu0 0.0
    %130 = vmatprep.subr.mxu0 0.0
    %131 = vmatpush1.msra.mxu0 0.0
    %132 = vmatprep.subr.mxu0 0.0
    %133 = vmatpush1.msra.mxu0 0.0
    %134 = vmatprep.subr.mxu0 0.0
    %135 = vmatpush1.msra.mxu0 0.0
    %136 = vmatprep.subr.mxu0 0.0
    %137 = vmatpush1.msra.mxu0 0.0
    %138 = vmatprep.subr.mxu0 0.0
    %139 = vmatpush1.msra.mxu0 0.0
    %140 = vmatprep.subr.mxu0 0.0
    %141 = vmatpush1.msra.mxu0 0.0
    %142 = vmatprep.subr.mxu0 0.0
    %143 = vmatpush1.msra.mxu0 0.0
    %144 = vmatprep.subr.mxu0 0.0
    %145 = vmatpush1.msra.mxu0 0.0
    %146 = vmatprep.subr.mxu0 0.0
    %147 = vmatpush1.msra.mxu0 0.0
    %148 = vmatprep.subr.mxu0 0.0
    %149 = vmatpush1.msra.mxu0 0.0
    %150 = vmatprep.subr.mxu0 0.0
    %151 = vmatpush1.msra.mxu0 0.0
    %152 = vmatprep.subr.mxu0 0.0
    %153 = vmatpush1.msra.mxu0 0.0
    %154 = vmatprep.subr.mxu0 0.0
    %155 = vmatpush1.msra.mxu0 0.0
    %156 = vmatprep.subr.mxu0 0.0
    %157 = vmatpush1.msra.mxu0 0.0
    %158 = vmatprep.subr.mxu0 0.0
    %159 = vmatpush1.msra.mxu0 0.0
    %160 = vmatprep.subr.mxu0 0.0
    %161 = vmatpush1.msra.mxu0 0.0
    %162 = vmatprep.subr.mxu0 0.0
    %163 = vmatpush1.msra.mxu0 0.0
    %164 = vmatprep.subr.mxu0 0.0
    %165 = vmatpush1.msra.mxu0 0.0
    %166 = vmatprep.subr.mxu0 0.0
    %167 = vmatpush1.msra.mxu0 0.0
    %168 = vmatprep.subr.mxu0 0.0
    %169 = vmatpush1.msra.mxu0 0.0
    %170 = vmatprep.subr.mxu0 0.0
    %171 = vmatpush1.msra.mxu0 0.0
    %172 = vmatprep.subr.mxu0 0.0
    %173 = vmatpush1.msra.mxu0 0.0
    %174 = vmatprep.subr.mxu0 0.0
    %175 = vmatpush1.msra.mxu0 0.0
    %176 = vmatprep.subr.mxu0 0.0
    %177 = vmatpush1.msra.mxu0 0.0
    %178 = vmatprep.subr.mxu0 0.0
    %179 = vmatpush1.msra.mxu0 0.0
    %180 = vmatprep.mubr.f32.mxu0 0.0
    %181 = vmatmul.mubr.f32.gmra.mrb[0].mxu0 %v107
    %v182 = vpop.f32.mrb[0].mxu0
    %v183 = vadd.f32 %v103, %v182
    %v184 = vpop.f32.mrb[0].mxu0
    %185 = vmatprep.mubr.f32.mxu0 0.0
    %186 = vmatmul.mubr.f32.gmra.mrb[0].mxu0 %v110
    %v187 = vpop.f32.mrb[0].mxu0
    %v188 = vadd.f32 %v103, %v187
    %v189 = vpop.f32.mrb[0].mxu0
    %190 = vdwg.mxu0
    %v191 = vmax.f32 %v183, 0.0
    %v192 = vmax.f32 %v188, 0.0
    %v193 = vld [vmem:[#allocation2] sm:$0xff]
    %v194 = vld [vmem:[#allocation2 + $0x8] sm:$0xff]
    %v195 = vld [vmem:[#allocation2 + $0x10] sm:$0xff]
    %v196 = vld [vmem:[#allocation2 + $0x18] sm:$0xff]
    %v197 = vld [vmem:[#allocation2 + $0x20] sm:$0xff]
    %v198 = vld [vmem:[#allocation2 + $0x28] sm:$0xff]
    %v199 = vld [vmem:[#allocation2 + $0x30] sm:$0xff]
    %v200 = vld [vmem:[#allocation2 + $0x38] sm:$0xff]
    %v201 = vld [vmem:[#allocation2 + $0x40] sm:$0xff]
    %v202 = vld [vmem:[#allocation2 + $0x48] sm:$0xff]
    %v203 = vld [vmem:[#allocation2 + $0x50] sm:$0xff]
    %v204 = vld [vmem:[#allocation2 + $0x58] sm:$0xff]
    %v205 = vld [vmem:[#allocation2 + $0x60] sm:$0xff]
    %v206 = vld [vmem:[#allocation2 + $0x68] sm:$0xff]
    %v207 = vld [vmem:[#allocation2 + $0x70] sm:$0xff]
    %v208 = vld [vmem:[#allocation2 + $0x78] sm:$0xff]
    %v209 = vld [vmem:[%s4] sm:$0x1]
    %v211 = vlaneseq
    %v212 = vshrl.u32 %v211, 7
    %v213 = vsub.s32 0, %v212
    %v214 = vrot.slane %v209, %v213
    %216 = vmatprep.subr.mxu0 0.0
    %217 = vmatpush1.msra.mxu0 %v193
    %218 = vmatprep.subr.mxu0 0.0
    %219 = vmatpush1.msra.mxu0 %v194
    %220 = vmatprep.subr.mxu0 0.0
    %221 = vmatpush1.msra.mxu0 %v195
    %222 = vmatprep.subr.mxu0 0.0
    %223 = vmatpush1.msra.mxu0 %v196
    %224 = vmatprep.subr.mxu0 0.0
    %225 = vmatpush1.msra.mxu0 %v197
    %226 = vmatprep.subr.mxu0 0.0
    %227 = vmatpush1.msra.mxu0 %v198
    %228 = vmatprep.subr.mxu0 0.0
    %229 = vmatpush1.msra.mxu0 %v199
    %230 = vmatprep.subr.mxu0 0.0
    %231 = vmatpush1.msra.mxu0 %v200
    %232 = vmatprep.subr.mxu0 0.0
    %233 = vmatpush1.msra.mxu0 %v201
    %234 = vmatprep.subr.mxu0 0.0
    %235 = vmatpush1.msra.mxu0 %v202
    %236 = vmatprep.subr.mxu0 0.0
    %237 = vmatpush1.msra.mxu0 %v203
    %238 = vmatprep.subr.mxu0 0.0
    %239 = vmatpush1.msra.mxu0 %v204
    %240 = vmatprep.subr.mxu0 0.0
    %241 = vmatpush1.msra.mxu0 %v205
    %242 = vmatprep.subr.mxu0 0.0
    %243 = vmatpush1.msra.mxu0 %v206
    %244 = vmatprep.subr.mxu0 0.0
    %245 = vmatpush1.msra.mxu0 %v207
    %246 = vmatprep.subr.mxu0 0.0
    %247 = vmatpush1.msra.mxu0 %v208
    %248 = vmatprep.subr.mxu0 0.0
    %249 = vmatpush1.msra.mxu0 0.0
    %250 = vmatprep.subr.mxu0 0.0
    %251 = vmatpush1.msra.mxu0 0.0
    %252 = vmatprep.subr.mxu0 0.0
    %253 = vmatpush1.msra.mxu0 0.0
    %254 = vmatprep.subr.mxu0 0.0
    %255 = vmatpush1.msra.mxu0 0.0
    %256 = vmatprep.subr.mxu0 0.0
    %257 = vmatpush1.msra.mxu0 0.0
    %258 = vmatprep.subr.mxu0 0.0
    %259 = vmatpush1.msra.mxu0 0.0
    %260 = vmatprep.subr.mxu0 0.0
    %261 = vmatpush1.msra.mxu0 0.0
    %262 = vmatprep.subr.mxu0 0.0
    %263 = vmatpush1.msra.mxu0 0.0
    %264 = vmatprep.subr.mxu0 0.0
    %265 = vmatpush1.msra.mxu0 0.0
    %266 = vmatprep.subr.mxu0 0.0
    %267 = vmatpush1.msra.mxu0 0.0
    %268 = vmatprep.subr.mxu0 0.0
    %269 = vmatpush1.msra.mxu0 0.0
    %270 = vmatprep.subr.mxu0 0.0
    %271 = vmatpush1.msra.mxu0 0.0
    %272 = vmatprep.subr.mxu0 0.0
    %273 = vmatpush1.msra.mxu0 0.0
    %274 = vmatprep.subr.mxu0 0.0
    %275 = vmatpush1.msra.mxu0 0.0
    %276 = vmatprep.subr.mxu0 0.0
    %277 = vmatpush1.msra.mxu0 0.0
    %278 = vmatprep.subr.mxu0 0.0
    %279 = vmatpush1.msra.mxu0 0.0
    %280 = vmatprep.mubr.f32.mxu0 0.0
    %281 = vmatmul.mubr.f32.gmra.mrb[0].mxu0 %v191
    %v282 = vpop.f32.mrb[0].mxu0
    %v283 = vadd.f32 %v214, %v282
    %v284 = vpop.f32.mrb[0].mxu0
    %285 = vmatprep.mubr.f32.mxu0 0.0
    %286 = vmatmul.mubr.f32.gmra.mrb[0].mxu0 %v192
    %v287 = vpop.f32.mrb[0].mxu0
    %v288 = vadd.f32 %v214, %v287
    %v289 = vpop.f32.mrb[0].mxu0
    %290 = vdwg.mxu0
    %v291 = vmax.f32 %v283, 0.0
    %v292 = vmax.f32 %v288, 0.0
    %v293 = vld [vmem:[#allocation5] sm:$0xff]
    %v294 = vld [vmem:[#allocation5 + $0x8] sm:$0xff]
    %v295 = vld [vmem:[#allocation5 + $0x10] sm:$0xff]
    %v296 = vld [vmem:[#allocation5 + $0x18] sm:$0xff]
    %v297 = vld [vmem:[#allocation5 + $0x20] sm:$0xff]
    %v298 = vld [vmem:[#allocation5 + $0x28] sm:$0xff]
    %v299 = vld [vmem:[#allocation5 + $0x30] sm:$0xff]
    %v300 = vld [vmem:[#allocation5 + $0x38] sm:$0xff]
    %v301 = vld [vmem:[#allocation5 + $0x40] sm:$0xff]
    %v302 = vld [vmem:[#allocation5 + $0x48] sm:$0xff]
    %v303 = vld [vmem:[#allocation5 + $0x50] sm:$0xff]
    %v304 = vld [vmem:[#allocation5 + $0x58] sm:$0xff]
    %v305 = vld [vmem:[#allocation5 + $0x60] sm:$0xff]
    %v306 = vld [vmem:[#allocation5 + $0x68] sm:$0xff]
    %v307 = vld [vmem:[#allocation5 + $0x70] sm:$0xff]
    %v308 = vld [vmem:[#allocation5 + $0x78] sm:$0xff]
    %v309 = vld [vmem:[%s6] sm:$0x1]
    %v311 = vlaneseq
    %v312 = vshrl.u32 %v311, 7
    %v313 = vsub.s32 0, %v312
    %v314 = vrot.slane %v309, %v313
    %316 = vmatprep.subr.mxu0 0.0
    %317 = vmatpush1.msra.mxu0 %v293
    %318 = vmatprep.subr.mxu0 0.0
    %319 = vmatpush1.msra.mxu0 %v294
    %320 = vmatprep.subr.mxu0 0.0
    %321 = vmatpush1.msra.mxu0 %v295
    %322 = vmatprep.subr.mxu0 0.0
    %323 = vmatpush1.msra.mxu0 %v296
    %324 = vmatprep.subr.mxu0 0.0
    %325 = vmatpush1.msra.mxu0 %v297
    %326 = vmatprep.subr.mxu0 0.0
    %327 = vmatpush1.msra.mxu0 %v298
    %328 = vmatprep.subr.mxu0 0.0
    %329 = vmatpush1.msra.mxu0 %v299
    %330 = vmatprep.subr.mxu0 0.0
    %331 = vmatpush1.msra.mxu0 %v300
    %332 = vmatprep.subr.mxu0 0.0
    %333 = vmatpush1.msra.mxu0 %v301
    %334 = vmatprep.subr.mxu0 0.0
    %335 = vmatpush1.msra.mxu0 %v302
    %336 = vmatprep.subr.mxu0 0.0
    %337 = vmatpush1.msra.mxu0 %v303
    %338 = vmatprep.subr.mxu0 0.0
    %339 = vmatpush1.msra.mxu0 %v304
    %340 = vmatprep.subr.mxu0 0.0
    %341 = vmatpush1.msra.mxu0 %v305
    %342 = vmatprep.subr.mxu0 0.0
    %343 = vmatpush1.msra.mxu0 %v306
    %344 = vmatprep.subr.mxu0 0.0
    %345 = vmatpush1.msra.mxu0 %v307
    %346 = vmatprep.subr.mxu0 0.0
    %347 = vmatpush1.msra.mxu0 %v308
    %348 = vmatprep.subr.mxu0 0.0
    %349 = vmatpush1.msra.mxu0 0.0
    %350 = vmatprep.subr.mxu0 0.0
    %351 = vmatpush1.msra.mxu0 0.0
    %352 = vmatprep.subr.mxu0 0.0
    %353 = vmatpush1.msra.mxu0 0.0
    %354 = vmatprep.subr.mxu0 0.0
    %355 = vmatpush1.msra.mxu0 0.0
    %356 = vmatprep.subr.mxu0 0.0
    %357 = vmatpush1.msra.mxu0 0.0
    %358 = vmatprep.subr.mxu0 0.0
    %359 = vmatpush1.msra.mxu0 0.0
    %360 = vmatprep.subr.mxu0 0.0
    %361 = vmatpush1.msra.mxu0 0.0
    %362 = vmatprep.subr.mxu0 0.0
    %363 = vmatpush1.msra.mxu0 0.0
    %364 = vmatprep.subr.mxu0 0.0
    %365 = vmatpush1.msra.mxu0 0.0
    %366 = vmatprep.subr.mxu0 0.0
    %367 = vmatpush1.msra.mxu0 0.0
    %368 = vmatprep.subr.mxu0 0.0
    %369 = vmatpush1.msra.mxu0 0.0
    %370 = vmatprep.subr.mxu0 0.0
    %371 = vmatpush1.msra.mxu0 0.0
    %372 = vmatprep.subr.mxu0 0.0
    %373 = vmatpush1.msra.mxu0 0.0
    %374 = vmatprep.subr.mxu0 0.0
    %375 = vmatpush1.msra.mxu0 0.0
    %376 = vmatprep.subr.mxu0 0.0
    %377 = vmatpush1.msra.mxu0 0.0
    %378 = vmatprep.subr.mxu0 0.0
    %379 = vmatpush1.msra.mxu0 0.0
    %380 = vmatprep.mubr.f32.mxu0 0.0
    %381 = vmatmul.mubr.f32.gmra.mrb[0].mxu0 %v291
    %v382 = vpop.f32.mrb[0].mxu0
    %v383 = vadd.f32 %v314, %v382
    %v384 = vpop.f32.mrb[0].mxu0
    %385 = vmatprep.mubr.f32.mxu0 0.0
    %386 = vmatmul.mubr.f32.gmra.mrb[0].mxu0 %v292
    %v387 = vpop.f32.mrb[0].mxu0
    %v388 = vadd.f32 %v314, %v387
    %v389 = vpop.f32.mrb[0].mxu0
    %390 = vdwg.mxu0
    %v391 = vmax.f32 %v383, 0.0
    %v392 = vmax.f32 %v388, 0.0
    %v393 = vpack.c.bf16 %v392, %v391
    %v394 = vld [vmem:[#allocation7] sm:$0xff]
    %v395 = vld [vmem:[#allocation7 + $0x8] sm:$0xff]
    %v396 = vld [vmem:[#allocation7 + $0x10] sm:$0xff]
    %v397 = vld [vmem:[#allocation7 + $0x18] sm:$0xff]
    %v398 = vld [vmem:[#allocation7 + $0x20] sm:$0xff]
    %v399 = vld [vmem:[#allocation7 + $0x28] sm:$0xff]
    %v400 = vld [vmem:[#allocation7 + $0x30] sm:$0xff]
    %v401 = vld [vmem:[#allocation7 + $0x38] sm:$0xff]
    %v402 = vld [vmem:[#allocation7 + $0x40] sm:$0xff]
    %v403 = vld [vmem:[#allocation7 + $0x48] sm:$0xff]
    %v404 = vld [vmem:[#allocation7 + $0x50] sm:$0xff]
    %v405 = vld [vmem:[#allocation7 + $0x58] sm:$0xff]
    %v406 = vld [vmem:[#allocation7 + $0x60] sm:$0xff]
    %v407 = vld [vmem:[#allocation7 + $0x68] sm:$0xff]
    %v408 = vld [vmem:[#allocation7 + $0x70] sm:$0xff]
    %v409 = vld [vmem:[#allocation7 + $0x78] sm:$0xff]
    %v410 = vld [vmem:[#allocation7 + $0x80] sm:$0xff]
    %v411 = vld [vmem:[#allocation7 + $0x88] sm:$0xff]
    %v412 = vld [vmem:[#allocation7 + $0x90] sm:$0xff]
    %v413 = vld [vmem:[#allocation7 + $0x98] sm:$0xff]
    %v414 = vld [vmem:[#allocation7 + $0xa0] sm:$0xff]
    %v415 = vld [vmem:[#allocation7 + $0xa8] sm:$0xff]
    %v416 = vld [vmem:[#allocation7 + $0xb0] sm:$0xff]
    %v417 = vld [vmem:[#allocation7 + $0xb8] sm:$0xff]
    %v418 = vld [vmem:[#allocation7 + $0xc0] sm:$0xff]
    %v419 = vld [vmem:[#allocation7 + $0xc8] sm:$0xff]
    %v420 = vld [vmem:[#allocation7 + $0xd0] sm:$0xff]
    %v421 = vld [vmem:[#allocation7 + $0xd8] sm:$0xff]
    %v422 = vld [vmem:[#allocation7 + $0xe0] sm:$0xff]
    %v423 = vld [vmem:[#allocation7 + $0xe8] sm:$0xff]
    %v424 = vld [vmem:[#allocation7 + $0xf0] sm:$0xff]
    %v425 = vld [vmem:[#allocation7 + $0xf8] sm:$0xff]
    %v426 = vld [vmem:[%s8] sm:$0xf]
    %v428 = vlaneseq
    %v429 = vshrl.u32 %v428, 7
    %v430 = vsub.s32 0, %v429
    %v431 = vrot.slane %v426, %v430
    %v432 = vlaneseq
    %v433 = vshrl.u32 %v432, 7
    %v434 = vsub.s32 1, %v433
    %v435 = vrot.slane %v426, %v434
    %v436 = vlaneseq
    %v437 = vshrl.u32 %v436, 7
    %v438 = vsub.s32 2, %v437
    %v439 = vrot.slane %v426, %v438
    %v440 = vlaneseq
    %v441 = vshrl.u32 %v440, 7
    %v442 = vsub.s32 3, %v441
    %v443 = vrot.slane %v426, %v442
    %v480 = vunpack.c.l.b16 %v394
    %v481 = vunpack.c.h.b16 %v394
    %v482 = vunpack.c.l.b16 %v395
    %v483 = vunpack.c.h.b16 %v395
    %v484 = vunpack.c.l.b16 %v396
    %v485 = vunpack.c.h.b16 %v396
    %v486 = vunpack.c.l.b16 %v397
    %v487 = vunpack.c.h.b16 %v397
    %v488 = vunpack.c.l.b16 %v398
    %v489 = vunpack.c.h.b16 %v398
    %v490 = vunpack.c.l.b16 %v399
    %v491 = vunpack.c.h.b16 %v399
    %v492 = vunpack.c.l.b16 %v400
    %v493 = vunpack.c.h.b16 %v400
    %v494 = vunpack.c.l.b16 %v401
    %v495 = vunpack.c.h.b16 %v401
    %v496 = vunpack.c.l.b16 %v402
    %v497 = vunpack.c.h.b16 %v402
    %v498 = vunpack.c.l.b16 %v403
    %v499 = vunpack.c.h.b16 %v403
    %v500 = vunpack.c.l.b16 %v404
    %v501 = vunpack.c.h.b16 %v404
    %v502 = vunpack.c.l.b16 %v405
    %v503 = vunpack.c.h.b16 %v405
    %v504 = vunpack.c.l.b16 %v406
    %v505 = vunpack.c.h.b16 %v406
    %v506 = vunpack.c.l.b16 %v407
    %v507 = vunpack.c.h.b16 %v407
    %v508 = vunpack.c.l.b16 %v408
    %v509 = vunpack.c.h.b16 %v408
    %v510 = vunpack.c.l.b16 %v409
    %v511 = vunpack.c.h.b16 %v409
    %v512 = vunpack.c.l.b16 %v410
    %v513 = vunpack.c.h.b16 %v410
    %v514 = vunpack.c.l.b16 %v411
    %v515 = vunpack.c.h.b16 %v411
    %v516 = vunpack.c.l.b16 %v412
    %v517 = vunpack.c.h.b16 %v412
    %v518 = vunpack.c.l.b16 %v413
    %v519 = vunpack.c.h.b16 %v413
    %v520 = vunpack.c.l.b16 %v414
    %v521 = vunpack.c.h.b16 %v414
    %v522 = vunpack.c.l.b16 %v415
    %v523 = vunpack.c.h.b16 %v415
    %v524 = vunpack.c.l.b16 %v416
    %v525 = vunpack.c.h.b16 %v416
    %v526 = vunpack.c.l.b16 %v417
    %v527 = vunpack.c.h.b16 %v417
    %v528 = vunpack.c.l.b16 %v418
    %v529 = vunpack.c.h.b16 %v418
    %v530 = vunpack.c.l.b16 %v419
    %v531 = vunpack.c.h.b16 %v419
    %v532 = vunpack.c.l.b16 %v420
    %v533 = vunpack.c.h.b16 %v420
    %v534 = vunpack.c.l.b16 %v421
    %v535 = vunpack.c.h.b16 %v421
    %v536 = vunpack.c.l.b16 %v422
    %v537 = vunpack.c.h.b16 %v422
    %v538 = vunpack.c.l.b16 %v423
    %v539 = vunpack.c.h.b16 %v423
    %v540 = vunpack.c.l.b16 %v424
    %v541 = vunpack.c.h.b16 %v424
    %v542 = vunpack.c.l.b16 %v425
    %v543 = vunpack.c.h.b16 %v425
    %v544 = vpack.c.b16 %v484, %v480
    %v545 = vpack.c.b16 %v485, %v481
    %v546 = vpack.c.b16 %v486, %v482
    %v547 = vpack.c.b16 %v487, %v483
    %v548 = vpack.c.b16 %v492, %v488
    %v549 = vpack.c.b16 %v493, %v489
    %v550 = vpack.c.b16 %v494, %v490
    %v551 = vpack.c.b16 %v495, %v491
    %v552 = vpack.c.b16 %v500, %v496
    %v553 = vpack.c.b16 %v501, %v497
    %v554 = vpack.c.b16 %v502, %v498
    %v555 = vpack.c.b16 %v503, %v499
    %v556 = vpack.c.b16 %v508, %v504
    %v557 = vpack.c.b16 %v509, %v505
    %v558 = vpack.c.b16 %v510, %v506
    %v559 = vpack.c.b16 %v511, %v507
    %v560 = vpack.c.b16 %v516, %v512
    %v561 = vpack.c.b16 %v517, %v513
    %v562 = vpack.c.b16 %v518, %v514
    %v563 = vpack.c.b16 %v519, %v515
    %v564 = vpack.c.b16 %v524, %v520
    %v565 = vpack.c.b16 %v525, %v521
    %v566 = vpack.c.b16 %v526, %v522
    %v567 = vpack.c.b16 %v527, %v523
    %v568 = vpack.c.b16 %v532, %v528
    %v569 = vpack.c.b16 %v533, %v529
    %v570 = vpack.c.b16 %v534, %v530
    %v571 = vpack.c.b16 %v535, %v531
    %v572 = vpack.c.b16 %v540, %v536
    %v573 = vpack.c.b16 %v541, %v537
    %v574 = vpack.c.b16 %v542, %v538
    %v575 = vpack.c.b16 %v543, %v539
    %608 = vmatprep.subr.bf16.mxu0 %v545
    %609 = vmatpush1.bf16.msra.mxu0 %v544
    %610 = vmatprep.subr.bf16.mxu0 %v549
    %611 = vmatpush1.bf16.msra.mxu0 %v548
    %612 = vmatprep.subr.bf16.mxu0 %v553
    %613 = vmatpush1.bf16.msra.mxu0 %v552
    %614 = vmatprep.subr.bf16.mxu0 %v557
    %615 = vmatpush1.bf16.msra.mxu0 %v556
    %616 = vmatprep.subr.bf16.mxu0 %v561
    %617 = vmatpush1.bf16.msra.mxu0 %v560
    %618 = vmatprep.subr.bf16.mxu0 %v565
    %619 = vmatpush1.bf16.msra.mxu0 %v564
    %620 = vmatprep.subr.bf16.mxu0 %v569
    %621 = vmatpush1.bf16.msra.mxu0 %v568
    %622 = vmatprep.subr.bf16.mxu0 %v573
    %623 = vmatpush1.bf16.msra.mxu0 %v572
    %624 = vmatprep.subr.bf16.mxu0 0
    %625 = vmatpush1.bf16.msra.mxu0 0
    %626 = vmatprep.subr.bf16.mxu0 0
    %627 = vmatpush1.bf16.msra.mxu0 0
    %628 = vmatprep.subr.bf16.mxu0 0
    %629 = vmatpush1.bf16.msra.mxu0 0
    %630 = vmatprep.subr.bf16.mxu0 0
    %631 = vmatpush1.bf16.msra.mxu0 0
    %632 = vmatprep.subr.bf16.mxu0 0
    %633 = vmatpush1.bf16.msra.mxu0 0
    %634 = vmatprep.subr.bf16.mxu0 0
    %635 = vmatpush1.bf16.msra.mxu0 0
    %636 = vmatprep.subr.bf16.mxu0 0
    %637 = vmatpush1.bf16.msra.mxu0 0
    %638 = vmatprep.subr.bf16.mxu0 0
    %639 = vmatpush1.bf16.msra.mxu0 0
    %640 = vmatprep.mubr.bf16.mxu0 0
    %641 = vmatmul.mubr.bf16.gmra.mrb[0].mxu0 %v393
    %v642 = vpop.f32.mrb[0].mxu0
    %v643 = vadd.f32 %v431, %v642
    %v644 = vpop.f32.mrb[0].mxu0
    %v645 = vadd.f32 %v435, %v644
    %v646 = vpop.f32.mrb[0].mxu0
    %v647 = vadd.f32 %v431, %v646
    %v648 = vpop.f32.mrb[0].mxu0
    %v649 = vadd.f32 %v435, %v648
    %650 = vdwg.mxu0
    %651 = vmatprep.subr.bf16.mxu0 %v547
    %652 = vmatpush1.bf16.msra.mxu0 %v546
    %653 = vmatprep.subr.bf16.mxu0 %v551
    %654 = vmatpush1.bf16.msra.mxu0 %v550
    %655 = vmatprep.subr.bf16.mxu0 %v555
    %656 = vmatpush1.bf16.msra.mxu0 %v554
    %657 = vmatprep.subr.bf16.mxu0 %v559
    %658 = vmatpush1.bf16.msra.mxu0 %v558
    %659 = vmatprep.subr.bf16.mxu0 %v563
    %660 = vmatpush1.bf16.msra.mxu0 %v562
    %661 = vmatprep.subr.bf16.mxu0 %v567
    %662 = vmatpush1.bf16.msra.mxu0 %v566
    %663 = vmatprep.subr.bf16.mxu0 %v571
    %664 = vmatpush1.bf16.msra.mxu0 %v570
    %665 = vmatprep.subr.bf16.mxu0 %v575
    %666 = vmatpush1.bf16.msra.mxu0 %v574
    %667 = vmatprep.subr.bf16.mxu0 0
    %668 = vmatpush1.bf16.msra.mxu0 0
    %669 = vmatprep.subr.bf16.mxu0 0
    %670 = vmatpush1.bf16.msra.mxu0 0
    %671 = vmatprep.subr.bf16.mxu0 0
    %672 = vmatpush1.bf16.msra.mxu0 0
    %673 = vmatprep.subr.bf16.mxu0 0
    %674 = vmatpush1.bf16.msra.mxu0 0
    %675 = vmatprep.subr.bf16.mxu0 0
    %676 = vmatpush1.bf16.msra.mxu0 0
    %677 = vmatprep.subr.bf16.mxu0 0
    %678 = vmatpush1.bf16.msra.mxu0 0
    %679 = vmatprep.subr.bf16.mxu0 0
    %680 = vmatpush1.bf16.msra.mxu0 0
    %681 = vmatprep.subr.bf16.mxu0 0
    %682 = vmatpush1.bf16.msra.mxu0 0
    %683 = vmatprep.mubr.bf16.mxu0 0
    %684 = vmatmul.mubr.bf16.gmra.mrb[0].mxu0 %v393
    %v685 = vpop.f32.mrb[0].mxu0
    %v686 = vadd.f32 %v439, %v685
    %v687 = vpop.f32.mrb[0].mxu0
    %v688 = vadd.f32 %v443, %v687
    %v689 = vpop.f32.mrb[0].mxu0
    %v690 = vadd.f32 %v439, %v689
    %v691 = vpop.f32.mrb[0].mxu0
    %v692 = vadd.f32 %v443, %v691
    %693 = vdwg.mxu0
    %v694 = vmax.f32 %v643, 0.0
    %v695 = vmax.f32 %v645, 0.0
    %v696 = vmax.f32 %v686, 0.0
    %v697 = vmax.f32 %v688, 0.0
    %v698 = vmax.f32 %v647, 0.0
    %v699 = vmax.f32 %v649, 0.0
    %v700 = vmax.f32 %v690, 0.0
    %v701 = vmax.f32 %v692, 0.0
    %v702 = vpack.c.bf16 %v698, %v694
    %v703 = vpack.c.bf16 %v699, %v695
    %v704 = vpack.c.bf16 %v700, %v696
    %v705 = vpack.c.bf16 %v701, %v697
    %v706 = vld [vmem:[#allocation8] sm:$0xf]
    %v707 = vld [vmem:[#allocation8 + $0x4] sm:$0xf]
    %v708 = vld [vmem:[#allocation8 + $0x8] sm:$0xf]
    %v709 = vld [vmem:[#allocation8 + $0xc] sm:$0xf]
    %v710 = vld [vmem:[#allocation8 + $0x10] sm:$0xf]
    %v711 = vld [vmem:[#allocation8 + $0x14] sm:$0xf]
    %v712 = vld [vmem:[#allocation8 + $0x18] sm:$0xf]
    %v713 = vld [vmem:[#allocation8 + $0x1c] sm:$0xf]
    %v714 = vld [vmem:[#allocation8 + $0x20] sm:$0xf]
    %v715 = vld [vmem:[#allocation8 + $0x24] sm:$0xf]
    %v716 = vld [vmem:[#allocation8 + $0x28] sm:$0xf]
    %v717 = vld [vmem:[#allocation8 + $0x2c] sm:$0xf]
    %v718 = vld [vmem:[#allocation8 + $0x30] sm:$0xf]
    %v719 = vld [vmem:[#allocation8 + $0x34] sm:$0xf]
    %v720 = vld [vmem:[#allocation8 + $0x38] sm:$0xf]
    %v721 = vld [vmem:[#allocation8 + $0x3c] sm:$0xf]
    %v722 = vld [vmem:[#allocation8 + $0x40] sm:$0xf]
    %v723 = vld [vmem:[#allocation8 + $0x44] sm:$0xf]
    %v724 = vld [vmem:[#allocation8 + $0x48] sm:$0xf]
    %v725 = vld [vmem:[#allocation8 + $0x4c] sm:$0xf]
    %v726 = vld [vmem:[#allocation8 + $0x50] sm:$0xf]
    %v727 = vld [vmem:[#allocation8 + $0x54] sm:$0xf]
    %v728 = vld [vmem:[#allocation8 + $0x58] sm:$0xf]
    %v729 = vld [vmem:[#allocation8 + $0x5c] sm:$0xf]
    %v730 = vld [vmem:[#allocation8 + $0x60] sm:$0xf]
    %v731 = vld [vmem:[#allocation8 + $0x64] sm:$0xf]
    %v732 = vld [vmem:[#allocation8 + $0x68] sm:$0xf]
    %v733 = vld [vmem:[#allocation8 + $0x6c] sm:$0xf]
    %v734 = vld [vmem:[#allocation8 + $0x70] sm:$0xf]
    %v735 = vld [vmem:[#allocation8 + $0x74] sm:$0xf]
    %v736 = vld [vmem:[#allocation8 + $0x78] sm:$0xf]
    %v737 = vld [vmem:[#allocation8 + $0x7c] sm:$0xf]
    %v738 = vld [vmem:[#allocation8 + $0x80] sm:$0xf]
    %v739 = vld [vmem:[#allocation8 + $0x84] sm:$0xf]
    %v740 = vld [vmem:[#allocation8 + $0x88] sm:$0xf]
    %v741 = vld [vmem:[#allocation8 + $0x8c] sm:$0xf]
    %v742 = vld [vmem:[#allocation8 + $0x90] sm:$0xf]
    %v743 = vld [vmem:[#allocation8 + $0x94] sm:$0xf]
    %v744 = vld [vmem:[#allocation8 + $0x98] sm:$0xf]
    %v745 = vld [vmem:[#allocation8 + $0x9c] sm:$0xf]
    %v746 = vld [vmem:[#allocation8 + $0xa0] sm:$0xf]
    %v747 = vld [vmem:[#allocation8 + $0xa4] sm:$0xf]
    %v748 = vld [vmem:[#allocation8 + $0xa8] sm:$0xf]
    %v749 = vld [vmem:[#allocation8 + $0xac] sm:$0xf]
    %v750 = vld [vmem:[#allocation8 + $0xb0] sm:$0xf]
    %v751 = vld [vmem:[#allocation8 + $0xb4] sm:$0xf]
    %v752 = vld [vmem:[#allocation8 + $0xb8] sm:$0xf]
    %v753 = vld [vmem:[#allocation8 + $0xbc] sm:$0xf]
    %v754 = vld [vmem:[#allocation8 + $0xc0] sm:$0xf]
    %v755 = vld [vmem:[#allocation8 + $0xc4] sm:$0xf]
    %v756 = vld [vmem:[#allocation8 + $0xc8] sm:$0xf]
    %v757 = vld [vmem:[#allocation8 + $0xcc] sm:$0xf]
    %v758 = vld [vmem:[#allocation8 + $0xd0] sm:$0xf]
    %v759 = vld [vmem:[#allocation8 + $0xd4] sm:$0xf]
    %v760 = vld [vmem:[#allocation8 + $0xd8] sm:$0xf]
    %v761 = vld [vmem:[#allocation8 + $0xdc] sm:$0xf]
    %v762 = vld [vmem:[#allocation8 + $0xe0] sm:$0xf]
    %v763 = vld [vmem:[#allocation8 + $0xe4] sm:$0xf]
    %v764 = vld [vmem:[#allocation8 + $0xe8] sm:$0xf]
    %v765 = vld [vmem:[#allocation8 + $0xec] sm:$0xf]
    %v766 = vld [vmem:[#allocation8 + $0xf0] sm:$0xf]
    %v767 = vld [vmem:[#allocation8 + $0xf4] sm:$0xf]
    %v768 = vld [vmem:[#allocation8 + $0xf8] sm:$0xf]
    %v769 = vld [vmem:[#allocation8 + $0xfc] sm:$0xf]
    %v770 = vld [vmem:[%s10] sm:$0x1]
    %v772 = vlaneseq
    %v773 = vshrl.u32 %v772, 7
    %v774 = vsub.s32 0, %v773
    %v775 = vrot.slane %v770, %v774
    %v841 = vunpack.c.l.b16 %v706
    %v842 = vunpack.c.l.b16 %v707
    %v843 = vunpack.c.l.b16 %v708
    %v844 = vunpack.c.l.b16 %v709
    %v845 = vunpack.c.l.b16 %v710
    %v846 = vunpack.c.l.b16 %v711
    %v847 = vunpack.c.l.b16 %v712
    %v848 = vunpack.c.l.b16 %v713
    %v849 = vunpack.c.l.b16 %v714
    %v850 = vunpack.c.l.b16 %v715
    %v851 = vunpack.c.l.b16 %v716
    %v852 = vunpack.c.l.b16 %v717
    %v853 = vunpack.c.l.b16 %v718
    %v854 = vunpack.c.l.b16 %v719
    %v855 = vunpack.c.l.b16 %v720
    %v856 = vunpack.c.l.b16 %v721
    %v857 = vunpack.c.l.b16 %v722
    %v858 = vunpack.c.l.b16 %v723
    %v859 = vunpack.c.l.b16 %v724
    %v860 = vunpack.c.l.b16 %v725
    %v861 = vunpack.c.l.b16 %v726
    %v862 = vunpack.c.l.b16 %v727
    %v863 = vunpack.c.l.b16 %v728
    %v864 = vunpack.c.l.b16 %v729
    %v865 = vunpack.c.l.b16 %v730
    %v866 = vunpack.c.l.b16 %v731
    %v867 = vunpack.c.l.b16 %v732
    %v868 = vunpack.c.l.b16 %v733
    %v869 = vunpack.c.l.b16 %v734
    %v870 = vunpack.c.l.b16 %v735
    %v871 = vunpack.c.l.b16 %v736
    %v872 = vunpack.c.l.b16 %v737
    %v873 = vunpack.c.l.b16 %v738
    %v874 = vunpack.c.l.b16 %v739
    %v875 = vunpack.c.l.b16 %v740
    %v876 = vunpack.c.l.b16 %v741
    %v877 = vunpack.c.l.b16 %v742
    %v878 = vunpack.c.l.b16 %v743
    %v879 = vunpack.c.l.b16 %v744
    %v880 = vunpack.c.l.b16 %v745
    %v881 = vunpack.c.l.b16 %v746
    %v882 = vunpack.c.l.b16 %v747
    %v883 = vunpack.c.l.b16 %v748
    %v884 = vunpack.c.l.b16 %v749
    %v885 = vunpack.c.l.b16 %v750
    %v886 = vunpack.c.l.b16 %v751
    %v887 = vunpack.c.l.b16 %v752
    %v888 = vunpack.c.l.b16 %v753
    %v889 = vunpack.c.l.b16 %v754
    %v890 = vunpack.c.l.b16 %v755
    %v891 = vunpack.c.l.b16 %v756
    %v892 = vunpack.c.l.b16 %v757
    %v893 = vunpack.c.l.b16 %v758
    %v894 = vunpack.c.l.b16 %v759
    %v895 = vunpack.c.l.b16 %v760
    %v896 = vunpack.c.l.b16 %v761
    %v897 = vunpack.c.l.b16 %v762
    %v898 = vunpack.c.l.b16 %v763
    %v899 = vunpack.c.l.b16 %v764
    %v900 = vunpack.c.l.b16 %v765
    %v901 = vunpack.c.l.b16 %v766
    %v902 = vunpack.c.l.b16 %v767
    %v903 = vunpack.c.l.b16 %v768
    %v904 = vunpack.c.l.b16 %v769
    %v905 = vpack.c.b16 %v842, %v841
    %v906 = vpack.c.b16 %v844, %v843
    %v907 = vpack.c.b16 %v846, %v845
    %v908 = vpack.c.b16 %v848, %v847
    %v909 = vpack.c.b16 %v850, %v849
    %v910 = vpack.c.b16 %v852, %v851
    %v911 = vpack.c.b16 %v854, %v853
    %v912 = vpack.c.b16 %v856, %v855
    %v913 = vpack.c.b16 %v858, %v857
    %v914 = vpack.c.b16 %v860, %v859
    %v915 = vpack.c.b16 %v862, %v861
    %v916 = vpack.c.b16 %v864, %v863
    %v917 = vpack.c.b16 %v866, %v865
    %v918 = vpack.c.b16 %v868, %v867
    %v919 = vpack.c.b16 %v870, %v869
    %v920 = vpack.c.b16 %v872, %v871
    %v921 = vpack.c.b16 %v874, %v873
    %v922 = vpack.c.b16 %v876, %v875
    %v923 = vpack.c.b16 %v878, %v877
    %v924 = vpack.c.b16 %v880, %v879
    %v925 = vpack.c.b16 %v882, %v881
    %v926 = vpack.c.b16 %v884, %v883
    %v927 = vpack.c.b16 %v886, %v885
    %v928 = vpack.c.b16 %v888, %v887
    %v929 = vpack.c.b16 %v890, %v889
    %v930 = vpack.c.b16 %v892, %v891
    %v931 = vpack.c.b16 %v894, %v893
    %v932 = vpack.c.b16 %v896, %v895
    %v933 = vpack.c.b16 %v898, %v897
    %v934 = vpack.c.b16 %v900, %v899
    %v935 = vpack.c.b16 %v902, %v901
    %v936 = vpack.c.b16 %v904, %v903
    %969 = vmatprep.subr.bf16.mxu0 0
    %970 = vmatpush1.bf16.msra.mxu0 %v905
    %971 = vmatprep.subr.bf16.mxu0 0
    %972 = vmatpush1.bf16.msra.mxu0 %v906
    %973 = vmatprep.subr.bf16.mxu0 0
    %974 = vmatpush1.bf16.msra.mxu0 %v907
    %975 = vmatprep.subr.bf16.mxu0 0
    %976 = vmatpush1.bf16.msra.mxu0 %v908
    %977 = vmatprep.subr.bf16.mxu0 0
    %978 = vmatpush1.bf16.msra.mxu0 %v909
    %979 = vmatprep.subr.bf16.mxu0 0
    %980 = vmatpush1.bf16.msra.mxu0 %v910
    %981 = vmatprep.subr.bf16.mxu0 0
    %982 = vmatpush1.bf16.msra.mxu0 %v911
    %983 = vmatprep.subr.bf16.mxu0 0
    %984 = vmatpush1.bf16.msra.mxu0 %v912
    %985 = vmatprep.subr.bf16.mxu0 0
    %986 = vmatpush1.bf16.msra.mxu0 %v913
    %987 = vmatprep.subr.bf16.mxu0 0
    %988 = vmatpush1.bf16.msra.mxu0 %v914
    %989 = vmatprep.subr.bf16.mxu0 0
    %990 = vmatpush1.bf16.msra.mxu0 %v915
    %991 = vmatprep.subr.bf16.mxu0 0
    %992 = vmatpush1.bf16.msra.mxu0 %v916
    %993 = vmatprep.subr.bf16.mxu0 0
    %994 = vmatpush1.bf16.msra.mxu0 %v917
    %995 = vmatprep.subr.bf16.mxu0 0
    %996 = vmatpush1.bf16.msra.mxu0 %v918
    %997 = vmatprep.subr.bf16.mxu0 0
    %998 = vmatpush1.bf16.msra.mxu0 %v919
    %999 = vmatprep.subr.bf16.mxu0 0
    %1000 = vmatpush1.bf16.msra.mxu0 %v920
    %1001 = vmatprep.mubr.bf16.mxu0 %v703
    %1002 = vmatmul.mubr.bf16.gmra.mrb[0].mxu0 %v702
    %v1003 = vpop.f32.mrb[0].mxu0
    %v1004 = vadd.f32 %v775, %v1003
    %v1005 = vpop.f32.mrb[0].mxu0
    %v1006 = vpop.f32.mrb[0].mxu0
    %v1007 = vadd.f32 %v775, %v1006
    %v1008 = vpop.f32.mrb[0].mxu0
    %1009 = vdwg.mxu0
    %1010 = vmatprep.subr.bf16.mxu0 0
    %1011 = vmatpush1.bf16.msra.mxu0 %v921
    %1012 = vmatprep.subr.bf16.mxu0 0
    %1013 = vmatpush1.bf16.msra.mxu0 %v922
    %1014 = vmatprep.subr.bf16.mxu0 0
    %1015 = vmatpush1.bf16.msra.mxu0 %v923
    %1016 = vmatprep.subr.bf16.mxu0 0
    %1017 = vmatpush1.bf16.msra.mxu0 %v924
    %1018 = vmatprep.subr.bf16.mxu0 0
    %1019 = vmatpush1.bf16.msra.mxu0 %v925
    %1020 = vmatprep.subr.bf16.mxu0 0
    %1021 = vmatpush1.bf16.msra.mxu0 %v926
    %1022 = vmatprep.subr.bf16.mxu0 0
    %1023 = vmatpush1.bf16.msra.mxu0 %v927
    %1024 = vmatprep.subr.bf16.mxu0 0
    %1025 = vmatpush1.bf16.msra.mxu0 %v928
    %1026 = vmatprep.subr.bf16.mxu0 0
    %1027 = vmatpush1.bf16.msra.mxu0 %v929
    %1028 = vmatprep.subr.bf16.mxu0 0
    %1029 = vmatpush1.bf16.msra.mxu0 %v930
    %1030 = vmatprep.subr.bf16.mxu0 0
    %1031 = vmatpush1.bf16.msra.mxu0 %v931
    %1032 = vmatprep.subr.bf16.mxu0 0
    %1033 = vmatpush1.bf16.msra.mxu0 %v932
    %1034 = vmatprep.subr.bf16.mxu0 0
    %1035 = vmatpush1.bf16.msra.mxu0 %v933
    %1036 = vmatprep.subr.bf16.mxu0 0
    %1037 = vmatpush1.bf16.msra.mxu0 %v934
    %1038 = vmatprep.subr.bf16.mxu0 0
    %1039 = vmatpush1.bf16.msra.mxu0 %v935
    %1040 = vmatprep.subr.bf16.mxu0 0
    %1041 = vmatpush1.bf16.msra.mxu0 %v936
    %1042 = vmatprep.mubr.bf16.mxu0 %v705
    %1043 = vmatmul.mubr.bf16.gmra.mrb[0].mxu0 %v704
    %v1044 = vpop.f32.mrb[0].mxu0
    %v1045 = vadd.f32 %v1004, %v1044
    %v1046 = vpop.f32.mrb[0].mxu0
    %v1047 = vpop.f32.mrb[0].mxu0
    %v1048 = vadd.f32 %v1007, %v1047
    %v1049 = vpop.f32.mrb[0].mxu0
    %1050 = vdwg.mxu0
    %v1051 = vlaneseq
    %v1052 = vand.u32 %v1051, 127
    %vm1053 = vcmp.lt.s32.totalorder %v1052, 102
    %vm1054 = vcmp.ge.s32.totalorder %v1052, 0
    %vm1055 = vcmp.lt.s32.totalorder %v1052, 51
    %vm1056 = vmand %vm1054, %vm1055
    %v1057 = vsel %vm1056, 1, 0
    %vm1058 = vcmp.eq.s32.totalorder %v1057, 1
    %v1059 = vsel %vm1058, %v1045, -inf
    %v1060 = vsel %vm1058, %v1048, -inf
    %1061 = vmax.xlane.f32.xlu0 %v1059
    %v1062 = vpop.xlane.xlu0 %1061
    %1063 = vmax.xlane.f32.xlu0 %v1060
    %v1064 = vpop.xlane.xlu0 %1063
    %v1065 = vsel %vm1058, %v1062, 0.0
    %v1066 = vsel %vm1058, %v1064, 0.0
    %v1067 = vadd.f32 %v1065, 0.0
    %v1068 = vadd.f32 %v1066, 0.0
    %vm1069 = vcmp.ge.s32.totalorder %v1052, 51
    %vm1070 = vmand %vm1069, %vm1053
    %v1071 = vsel %vm1070, 1, 0
    %vm1072 = vcmp.eq.s32.totalorder %v1071, 1
    %v1073 = vsel %vm1072, %v1045, -inf
    %v1074 = vsel %vm1072, %v1048, -inf
    %1075 = vmax.xlane.f32.xlu0 %v1073
    %v1076 = vpop.xlane.xlu0 %1075
    %1077 = vmax.xlane.f32.xlu0 %v1074
    %v1078 = vpop.xlane.xlu0 %1077
    %v1079 = vsel %vm1072, %v1076, 0.0
    %v1080 = vsel %vm1072, %v1078, 0.0
    %v1081 = vadd.f32 %v1067, %v1079
    %v1082 = vadd.f32 %v1068, %v1080
    %v1083 = vsub.f32 %v1045, %v1081
    %v1084 = vsub.f32 %v1048, %v1082
    %v1085 = vmul.f32 %v1083, 1.442695
    %v1086 = vpow.pop %v1085
    %v1087 = vmul.f32 %v1084, 1.442695
    %v1088 = vpow.pop %v1087
    %v1089 = vsel %vm1053, 1, 0
    %vm1090 = vcmp.eq.s32.totalorder %v1089, 1
    %v1091 = vsel %vm1090, %v1086, 0.0
    %v1092 = vsel %vm1090, %v1088, 0.0
    %v1093 = vsel %vm1058, %v1091, 0.0
    %v1094 = vsel %vm1058, %v1092, 0.0
    %1095 = vadd.xlane.f32.xlu0 %v1093
    %v1096 = vpop.xlane.xlu0 %1095
    %1097 = vadd.xlane.f32.xlu0 %v1094
    %v1098 = vpop.xlane.xlu0 %1097
    %v1099 = vsel %vm1058, %v1096, 0.0
    %v1100 = vsel %vm1058, %v1098, 0.0
    %v1101 = vadd.f32 %v1099, 0.0
    %v1102 = vadd.f32 %v1100, 0.0
    %v1103 = vsel %vm1072, %v1091, 0.0
    %v1104 = vsel %vm1072, %v1092, 0.0
    %1105 = vadd.xlane.f32.xlu0 %v1103
    %v1106 = vpop.xlane.xlu0 %1105
    %1107 = vadd.xlane.f32.xlu0 %v1104
    %v1108 = vpop.xlane.xlu0 %1107
    %v1109 = vsel %vm1072, %v1106, 0.0
    %v1110 = vsel %vm1072, %v1108, 0.0
    %v1111 = vadd.f32 %v1101, %v1109
    %v1112 = vadd.f32 %v1102, %v1110
    %v1113 = vsel %vm1090, %v1111, 1.0
    %v1114 = vsel %vm1090, %v1112, 1.0
    %v1115 = vrcp.pop %v1113
    %v1116 = vmul.f32 %v1091, %v1115
    %v1117 = vrcp.pop %v1114
    %v1118 = vmul.f32 %v1092, %v1117
    %1119 = vst [vmem:[#allocation10] sm:$0xff] %v1116
    %1120 = vst [vmem:[#allocation10 + $0x8] sm:$0xff] %v1118
    // Predicated region
    $region62: #{tpu_custom_call.1} parent=1 // pred_check
      _
    $region63: #{tpu_custom_call.1} parent=1 // pred_check_branch
      %1122 = sbr.rel (0) target = $region65
    $region64: #{tpu_custom_call.1} parent=1 // pred_region
      %s1124 = ssub.s32 256, 256
      %1125 = vsyncadd [#allocation4], %s1124
      %s1126 = sshll.u32 [#allocation10], 4
      %s1127 = int_to_ptr.vmem [resolvable:$true] %s1126
      %1132 = dma.vmem_to_hbm [thread:$0]  %s1127, 256, %s11, [#allocation4], 128, 128, 8
    $region65: #{tpu_custom_call.1} parent=1 // pred_fallthru
      _
    // Predicated region
    $region66: #{tpu_custom_call.1} parent=1 // pred_check
      _
    $region67: #{tpu_custom_call.1} parent=1 // pred_check_branch
      %1134 = sbr.rel (0) target = $region69
    $region68: #{tpu_custom_call.1} parent=1 // pred_region
      %1135 = dma.done [#allocation4], 256
    $region69: #{tpu_custom_call.1} parent=1 // pred_fallthru
      _
    %1136 = vsyncpa [#allocation3], 1
    %1137 = vsyncpa [#allocation6], 1
    %1138 = vsyncpa [#allocation9], 1
    %1139 = vsyncpa [#allocation4], 1

</llo_original>
